<compile_context>
chip_gen: v7x
topology: tpu7x:2x2x1
jax: 0.10.0
libtpu: 0.0.40
codegen_flags: <defaults>
</compile_context>

<pallas_src>
import functools

import jax
import jax.numpy as jnp
from jax import lax
from jax.experimental import pallas as pl
from jax.experimental.pallas import tpu as pltpu

LN_EPS = 1e-5  # PyTorch nn.LayerNorm default


def _round_up(x, m):
    return ((x + m - 1) // m) * m


def _choose_block_b(batch):
    """Batch tile: big (<=256), multiple of 8, >=2 grid steps when possible."""
    bb = min(256, _round_up(batch, 8))
    # Keep at least 2 grid steps for large batches so the "parallel" grid axis
    # can shard across v7x's two TensorCores.
    if batch > 128 and pl.cdiv(batch, bb) < 2:
        bb = _round_up(pl.cdiv(batch, 2), 8)
    return bb


def _mlp_value_kernel(x_ref,
                      w1_ref, b1_ref, g1_ref, be1_ref,
                      w2_ref, b2_ref, g2_ref, be2_ref,
                      w3_ref, b3_ref,
                      o_ref):
    """Fused: (Linear -> ReLU -> LayerNorm -> Dropout=id) x2 -> Linear(H2->1)."""
    x = x_ref[...]  # f32 [block_b, Dp]

    # ---- Block 1: Linear (bf16 MXU, f32 acc) + ReLU + LayerNorm ----
    h = jnp.dot(x.astype(jnp.bfloat16), w1_ref[...],
                preferred_element_type=jnp.float32) + b1_ref[...]
    h = jnp.maximum(h, 0.0)
    mu = jnp.mean(h, axis=-1, keepdims=True)
    ex2 = jnp.mean(h * h, axis=-1, keepdims=True)
    var = jnp.maximum(ex2 - mu * mu, 0.0)          # single-pass LN stats
    h = (h - mu) * lax.rsqrt(var + LN_EPS) * g1_ref[...] + be1_ref[...]
    # Dropout(0.1): identity in eval mode.
    # TODO(synk): training-mode dropout (pltpu.prng_random_bits mask) not emitted.

    # ---- Block 2: Linear (bf16 MXU, f32 acc) + ReLU + LayerNorm ----
    h = jnp.dot(h.astype(jnp.bfloat16), w2_ref[...],
                preferred_element_type=jnp.float32) + b2_ref[...]
    h = jnp.maximum(h, 0.0)
    mu = jnp.mean(h, axis=-1, keepdims=True)
    ex2 = jnp.mean(h * h, axis=-1, keepdims=True)
    var = jnp.maximum(ex2 - mu * mu, 0.0)
    h = (h - mu) * lax.rsqrt(var + LN_EPS) * g2_ref[...] + be2_ref[...]

    # ---- Final Linear (H2 -> 1): VPU multiply + lane reduce (skip 1-col MXU) ----
    v = jnp.sum(h * w3_ref[...], axis=-1, keepdims=True) + b3_ref[...]
    o_ref[...] = v.astype(o_ref.dtype)


@functools.partial(jax.jit, static_argnames=("block_b",))
def _value_forward(observations,
                   w1, b1, g1, be1, w2, b2, g2, be2, w3, b3,
                   *, block_b):
    B, D = observations.shape
    H1 = w1.shape[1]
    H2 = w2.shape[1]

    # Pad obs_dim to a multiple of 128 (aligned lanes / full MXU K pass).
    Dp = _round_up(D, 128)
    # Pad batch to a multiple of block_b (masked tail handled by slicing after).
    Bp = pl.cdiv(B, block_b) * block_b

    x_pad = jnp.pad(observations, ((0, Bp - B), (0, Dp - D)))
    w1_p = jnp.pad(w1, ((0, Dp - D), (0, 0))).astype(jnp.bfloat16)  # zero rows: no effect
    w2_c = w2.astype(jnp.bfloat16)
    w3_row = jnp.transpose(w3).astype(jnp.float32)                  # (1, H2) row for VPU path

    grid = (Bp // block_b,)

    # Full-weight blocks with constant index_map (held resident, no per-step re-DMA).
    def rep(shape):
        return pl.BlockSpec(shape, lambda i: (0,) * len(shape))

    out = pl.pallas_call(
        _mlp_value_kernel,
        out_shape=jax.ShapeDtypeStruct((Bp, 1), jnp.float32),
        grid_spec=pltpu.PrefetchScalarGridSpec(
            num_scalar_prefetch=0,
            grid=grid,
            in_specs=[
                pl.BlockSpec((block_b, Dp), lambda i: (i, 0)),              # x tile
                rep((Dp, H1)), rep((1, H1)), rep((1, H1)), rep((1, H1)),    # W1,b1,gamma1,beta1
                rep((H1, H2)), rep((1, H2)), rep((1, H2)), rep((1, H2)),    # W2,b2,gamma2,beta2
                rep((1, H2)), rep((1, 1)),                                  # w3 row, b3
            ],
            out_specs=pl.BlockSpec((block_b, 1), lambda i: (i, 0)),
        ),
        compiler_params=pltpu.CompilerParams(
            dimension_semantics=("parallel",)),
    )(x_pad,
      w1_p, b1, g1, be1,
      w2_c, b2, g2, be2,
      w3_row, b3)

    return out[:B, 0]  # drop batch padding, squeeze(-1)


def network_value_function(observations, params, *, block_b=None):
    """observations: [B, obs_dim] float32 -> values: [B] float32."""
    B, _ = observations.shape
    if block_b is None:
        block_b = _choose_block_b(B)
    return _value_forward(observations, *params, block_b=block_b)


def init_params(key, obs_dim, hidden_dims=(256, 256)):
    """Deterministic synthetic parameters (shapes match the PyTorch module)."""
    params = []
    prev = obs_dim
    keys = jax.random.split(key, 2 * len(hidden_dims) + 1)
    ki = 0
    for h in hidden_dims:
        w = jax.random.normal(keys[ki], (prev, h), jnp.float32) * (1.0 / jnp.sqrt(prev))
        ki += 1
        b = jax.random.normal(keys[ki], (1, h), jnp.float32) * 0.01
        ki += 1
        gamma = jnp.ones((1, h), jnp.float32)
        beta = jnp.zeros((1, h), jnp.float32)
        params.extend([w, b, gamma, beta])
        prev = h
    w_out = jax.random.normal(keys[ki], (prev, 1), jnp.float32) * (1.0 / jnp.sqrt(prev))
    b_out = jnp.zeros((1, 1), jnp.float32)
    params.extend([w_out, b_out])
    return tuple(params)


def _reference(observations, params, *, bf16_matmul=False):
    """Pure-JAX reference; bf16_matmul=True mirrors the kernel's MXU dtypes."""
    (w1, b1, g1, be1, w2, b2, g2, be2, w3, b3) = params

    def mm(a, w):
        if bf16_matmul:
            return jnp.dot(a.astype(jnp.bfloat16), w.astype(jnp.bfloat16),
                           preferred_element_type=jnp.float32)
        return a @ w

    def block(x, w, b, g, be):
        h = jnp.maximum(mm(x, w) + b, 0.0)
        mu = jnp.mean(h, axis=-1, keepdims=True)
        var = jnp.mean((h - mu) ** 2, axis=-1, keepdims=True)
        return (h - mu) / jnp.sqrt(var + LN_EPS) * g + be

    h = block(observations, w1, b1, g1, be1)
    h = block(h, w2, b2, g2, be2)
    return (h @ w3 + b3)[:, 0]


if __name__ == "__main__":
    key = jax.random.PRNGKey(0)
    k_param, k_obs = jax.random.split(key)

    B, OBS_DIM = 37, 60          # exercises batch + feature padding paths
    HIDDEN = (256, 256)          # PyTorch module defaults

    params = init_params(k_param, OBS_DIM, HIDDEN)
    observations = jax.random.normal(k_obs, (B, OBS_DIM), jnp.float32)

    values = network_value_function(observations, params)
    values = jax.block_until_ready(values)
    assert values.shape == (B,), values.shape

    # Tight check against a reference using the same bf16 matmul dtypes.
    ref_bf16 = _reference(observations, params, bf16_matmul=True)
    assert jnp.allclose(values, ref_bf16, atol=5e-3, rtol=5e-3), (
        float(jnp.max(jnp.abs(values - ref_bf16))))

    # Loose check against the pure-f32 (PyTorch-equivalent) reference.
    ref_f32 = _reference(observations, params, bf16_matmul=False)
    assert jnp.allclose(values, ref_f32, atol=5e-2, rtol=5e-2), (
        float(jnp.max(jnp.abs(values - ref_f32))))

    print("KERNEL_OK")
</pallas_src>

<mosaic_0001>
module attributes {stable_mosaic.version = 11 : i64} {
  func.func @_mlp_value_kernel(%arg0: i32, %arg1: memref<40x128xf32, #tpu.memory_space<vmem>>, %arg2: memref<128x256xbf16, #tpu.memory_space<vmem>>, %arg3: memref<1x256xf32, #tpu.memory_space<vmem>>, %arg4: memref<1x256xf32, #tpu.memory_space<vmem>>, %arg5: memref<1x256xf32, #tpu.memory_space<vmem>>, %arg6: memref<256x256xbf16, #tpu.memory_space<vmem>>, %arg7: memref<1x256xf32, #tpu.memory_space<vmem>>, %arg8: memref<1x256xf32, #tpu.memory_space<vmem>>, %arg9: memref<1x256xf32, #tpu.memory_space<vmem>>, %arg10: memref<1x256xf32, #tpu.memory_space<vmem>>, %arg11: memref<1x1xf32, #tpu.memory_space<vmem>>, %arg12: memref<40x1xf32, #tpu.memory_space<vmem>>) attributes {dimension_semantics = [#tpu.dimension_semantics<parallel>], iteration_bounds = array<i64: 1>, scalar_prefetch = 0 : i64, scratch_operands = 0 : i64, tpu.core_type = #tpu.core_type<tc>, window_params = [{transform_indices = @transform_0, window_bounds = array<i64: 40, 128>}, {pipeline_mode = #tpu.pipeline_mode<synchronous>, transform_indices = @transform_1, window_bounds = array<i64: 128, 256>}, {pipeline_mode = #tpu.pipeline_mode<synchronous>, transform_indices = @transform_2, window_bounds = array<i64: 1, 256>}, {pipeline_mode = #tpu.pipeline_mode<synchronous>, transform_indices = @transform_3, window_bounds = array<i64: 1, 256>}, {pipeline_mode = #tpu.pipeline_mode<synchronous>, transform_indices = @transform_4, window_bounds = array<i64: 1, 256>}, {pipeline_mode = #tpu.pipeline_mode<synchronous>, transform_indices = @transform_5, window_bounds = array<i64: 256, 256>}, {pipeline_mode = #tpu.pipeline_mode<synchronous>, transform_indices = @transform_6, window_bounds = array<i64: 1, 256>}, {pipeline_mode = #tpu.pipeline_mode<synchronous>, transform_indices = @transform_7, window_bounds = array<i64: 1, 256>}, {pipeline_mode = #tpu.pipeline_mode<synchronous>, transform_indices = @transform_8, window_bounds = array<i64: 1, 256>}, {pipeline_mode = #tpu.pipeline_mode<synchronous>, transform_indices = @transform_9, window_bounds = array<i64: 1, 256>}, {pipeline_mode = #tpu.pipeline_mode<synchronous>, transform_indices = @transform_10, window_bounds = array<i64: 1, 1>}, {transform_indices = @transform_11, window_bounds = array<i64: 40, 1>}]} {
    %c0 = arith.constant 0 : index
    %c0_0 = arith.constant 0 : index
    %0 = vector.load %arg1[%c0, %c0_0] : memref<40x128xf32, #tpu.memory_space<vmem>>, vector<40x128xf32>
    %1 = arith.truncf %0 : vector<40x128xf32> to vector<40x128xbf16>
    %c0_1 = arith.constant 0 : index
    %c0_2 = arith.constant 0 : index
    %2 = vector.load %arg2[%c0_1, %c0_2] : memref<128x256xbf16, #tpu.memory_space<vmem>>, vector<128x256xbf16>
    %cst = arith.constant dense<0.000000e+00> : vector<40x256xf32>
    %3 = tpu.matmul %1, %2, %cst {dimension_numbers = #tpu.dot_dimension_numbers<[1], [0], [0], [1], [0, 0, 1, 1], [], []>} : vector<40x128xbf16>, vector<128x256xbf16>, vector<40x256xf32> -> vector<40x256xf32>
    %c0_3 = arith.constant 0 : index
    %c0_4 = arith.constant 0 : index
    %4 = vector.load %arg3[%c0_3, %c0_4] : memref<1x256xf32, #tpu.memory_space<vmem>>, vector<1x256xf32>
    %5 = vector.broadcast %4 : vector<1x256xf32> to vector<40x256xf32>
    %6 = arith.addf %3, %5 : vector<40x256xf32>
    %cst_5 = arith.constant 0.000000e+00 : f32
    %7 = vector.broadcast %cst_5 : f32 to vector<40x256xf32>
    %8 = arith.maximumf %6, %7 : vector<40x256xf32>
    %cst_6 = arith.constant dense<0.000000e+00> : vector<40xf32>
    %9 = vector.multi_reduction <add>, %8, %cst_6 [1] : vector<40x256xf32> to vector<40xf32>
    %10 = vector.shape_cast %9 : vector<40xf32> to vector<40x1xf32>
    %cst_7 = arith.constant 2.560000e+02 : f32
    %11 = vector.broadcast %cst_7 : f32 to vector<40x1xf32>
    %12 = arith.divf %10, %11 : vector<40x1xf32>
    %13 = arith.mulf %8, %8 : vector<40x256xf32>
    %cst_8 = arith.constant dense<0.000000e+00> : vector<40xf32>
    %14 = vector.multi_reduction <add>, %13, %cst_8 [1] : vector<40x256xf32> to vector<40xf32>
    %15 = vector.shape_cast %14 : vector<40xf32> to vector<40x1xf32>
    %cst_9 = arith.constant 2.560000e+02 : f32
    %16 = vector.broadcast %cst_9 : f32 to vector<40x1xf32>
    %17 = arith.divf %15, %16 : vector<40x1xf32>
    %18 = arith.mulf %12, %12 : vector<40x1xf32>
    %19 = arith.subf %17, %18 : vector<40x1xf32>
    %cst_10 = arith.constant 0.000000e+00 : f32
    %20 = vector.broadcast %cst_10 : f32 to vector<40x1xf32>
    %21 = arith.maximumf %19, %20 : vector<40x1xf32>
    %22 = vector.broadcast %12 : vector<40x1xf32> to vector<40x256xf32>
    %23 = arith.subf %8, %22 : vector<40x256xf32>
    %cst_11 = arith.constant 9.99999974E-6 : f32
    %24 = vector.broadcast %cst_11 : f32 to vector<40x1xf32>
    %25 = arith.addf %21, %24 : vector<40x1xf32>
    %26 = math.rsqrt %25 : vector<40x1xf32>
    %27 = vector.broadcast %26 : vector<40x1xf32> to vector<40x256xf32>
    %28 = arith.mulf %23, %27 : vector<40x256xf32>
    %c0_12 = arith.constant 0 : index
    %c0_13 = arith.constant 0 : index
    %29 = vector.load %arg4[%c0_12, %c0_13] : memref<1x256xf32, #tpu.memory_space<vmem>>, vector<1x256xf32>
    %30 = vector.broadcast %29 : vector<1x256xf32> to vector<40x256xf32>
    %31 = arith.mulf %28, %30 : vector<40x256xf32>
    %c0_14 = arith.constant 0 : index
    %c0_15 = arith.constant 0 : index
    %32 = vector.load %arg5[%c0_14, %c0_15] : memref<1x256xf32, #tpu.memory_space<vmem>>, vector<1x256xf32>
    %33 = vector.broadcast %32 : vector<1x256xf32> to vector<40x256xf32>
    %34 = arith.addf %31, %33 : vector<40x256xf32>
    %35 = arith.truncf %34 : vector<40x256xf32> to vector<40x256xbf16>
    %c0_16 = arith.constant 0 : index
    %c0_17 = arith.constant 0 : index
    %36 = vector.load %arg6[%c0_16, %c0_17] : memref<256x256xbf16, #tpu.memory_space<vmem>>, vector<256x256xbf16>
    %cst_18 = arith.constant dense<0.000000e+00> : vector<40x256xf32>
    %37 = tpu.matmul %35, %36, %cst_18 {dimension_numbers = #tpu.dot_dimension_numbers<[1], [0], [0], [1], [0, 0, 1, 1], [], []>} : vector<40x256xbf16>, vector<256x256xbf16>, vector<40x256xf32> -> vector<40x256xf32>
    %c0_19 = arith.constant 0 : index
    %c0_20 = arith.constant 0 : index
    %38 = vector.load %arg7[%c0_19, %c0_20] : memref<1x256xf32, #tpu.memory_space<vmem>>, vector<1x256xf32>
    %39 = vector.broadcast %38 : vector<1x256xf32> to vector<40x256xf32>
    %40 = arith.addf %37, %39 : vector<40x256xf32>
    %cst_21 = arith.constant 0.000000e+00 : f32
    %41 = vector.broadcast %cst_21 : f32 to vector<40x256xf32>
    %42 = arith.maximumf %40, %41 : vector<40x256xf32>
    %cst_22 = arith.constant dense<0.000000e+00> : vector<40xf32>
    %43 = vector.multi_reduction <add>, %42, %cst_22 [1] : vector<40x256xf32> to vector<40xf32>
    %44 = vector.shape_cast %43 : vector<40xf32> to vector<40x1xf32>
    %cst_23 = arith.constant 2.560000e+02 : f32
    %45 = vector.broadcast %cst_23 : f32 to vector<40x1xf32>
    %46 = arith.divf %44, %45 : vector<40x1xf32>
    %47 = arith.mulf %42, %42 : vector<40x256xf32>
    %cst_24 = arith.constant dense<0.000000e+00> : vector<40xf32>
    %48 = vector.multi_reduction <add>, %47, %cst_24 [1] : vector<40x256xf32> to vector<40xf32>
    %49 = vector.shape_cast %48 : vector<40xf32> to vector<40x1xf32>
    %cst_25 = arith.constant 2.560000e+02 : f32
    %50 = vector.broadcast %cst_25 : f32 to vector<40x1xf32>
    %51 = arith.divf %49, %50 : vector<40x1xf32>
    %52 = arith.mulf %46, %46 : vector<40x1xf32>
    %53 = arith.subf %51, %52 : vector<40x1xf32>
    %cst_26 = arith.constant 0.000000e+00 : f32
    %54 = vector.broadcast %cst_26 : f32 to vector<40x1xf32>
    %55 = arith.maximumf %53, %54 : vector<40x1xf32>
    %56 = vector.broadcast %46 : vector<40x1xf32> to vector<40x256xf32>
    %57 = arith.subf %42, %56 : vector<40x256xf32>
    %cst_27 = arith.constant 9.99999974E-6 : f32
    %58 = vector.broadcast %cst_27 : f32 to vector<40x1xf32>
    %59 = arith.addf %55, %58 : vector<40x1xf32>
    %60 = math.rsqrt %59 : vector<40x1xf32>
    %61 = vector.broadcast %60 : vector<40x1xf32> to vector<40x256xf32>
    %62 = arith.mulf %57, %61 : vector<40x256xf32>
    %c0_28 = arith.constant 0 : index
    %c0_29 = arith.constant 0 : index
    %63 = vector.load %arg8[%c0_28, %c0_29] : memref<1x256xf32, #tpu.memory_space<vmem>>, vector<1x256xf32>
    %64 = vector.broadcast %63 : vector<1x256xf32> to vector<40x256xf32>
    %65 = arith.mulf %62, %64 : vector<40x256xf32>
    %c0_30 = arith.constant 0 : index
    %c0_31 = arith.constant 0 : index
    %66 = vector.load %arg9[%c0_30, %c0_31] : memref<1x256xf32, #tpu.memory_space<vmem>>, vector<1x256xf32>
    %67 = vector.broadcast %66 : vector<1x256xf32> to vector<40x256xf32>
    %68 = arith.addf %65, %67 : vector<40x256xf32>
    %c0_32 = arith.constant 0 : index
    %c0_33 = arith.constant 0 : index
    %69 = vector.load %arg10[%c0_32, %c0_33] : memref<1x256xf32, #tpu.memory_space<vmem>>, vector<1x256xf32>
    %70 = vector.broadcast %69 : vector<1x256xf32> to vector<40x256xf32>
    %71 = arith.mulf %68, %70 : vector<40x256xf32>
    %cst_34 = arith.constant dense<0.000000e+00> : vector<40xf32>
    %72 = vector.multi_reduction <add>, %71, %cst_34 [1] : vector<40x256xf32> to vector<40xf32>
    %73 = vector.shape_cast %72 : vector<40xf32> to vector<40x1xf32>
    %c0_35 = arith.constant 0 : index
    %c0_36 = arith.constant 0 : index
    %74 = vector.load %arg11[%c0_35, %c0_36] : memref<1x1xf32, #tpu.memory_space<vmem>>, vector<1x1xf32>
    %75 = vector.broadcast %74 : vector<1x1xf32> to vector<40x1xf32>
    %76 = arith.addf %73, %75 : vector<40x1xf32>
    %c0_37 = arith.constant 0 : index
    %c0_38 = arith.constant 0 : index
    %77 = vector.load %arg12[%c0_37, %c0_38] : memref<40x1xf32, #tpu.memory_space<vmem>>, vector<40x1xf32>
    tpu.vector_store %arg12[%c0_37, %c0_38], %76 {strides = array<i32>} : memref<40x1xf32, #tpu.memory_space<vmem>>, vector<40x1xf32>,
    return
  }
  func.func @transform_0(%arg0: i32) -> (i32, i32) {
    %c0_i32 = arith.constant 0 : i32
    %c0_i32_0 = arith.constant 0 : i32
    return %arg0, %c0_i32 : i32, i32
  }
  func.func @transform_1(%arg0: i32) -> (i32, i32) {
    %c0_i32 = arith.constant 0 : i32
    %c0_i32_0 = arith.constant 0 : i32
    %c0_i32_1 = arith.constant 0 : i32
    return %c0_i32, %c0_i32_0 : i32, i32
  }
  func.func @transform_2(%arg0: i32) -> (i32, i32) {
    %c0_i32 = arith.constant 0 : i32
    %c0_i32_0 = arith.constant 0 : i32
    %c0_i32_1 = arith.constant 0 : i32
    return %c0_i32, %c0_i32_0 : i32, i32
  }
  func.func @transform_3(%arg0: i32) -> (i32, i32) {
    %c0_i32 = arith.constant 0 : i32
    %c0_i32_0 = arith.constant 0 : i32
    %c0_i32_1 = arith.constant 0 : i32
    return %c0_i32, %c0_i32_0 : i32, i32
  }
  func.func @transform_4(%arg0: i32) -> (i32, i32) {
    %c0_i32 = arith.constant 0 : i32
    %c0_i32_0 = arith.constant 0 : i32
    %c0_i32_1 = arith.constant 0 : i32
    return %c0_i32, %c0_i32_0 : i32, i32
  }
  func.func @transform_5(%arg0: i32) -> (i32, i32) {
    %c0_i32 = arith.constant 0 : i32
    %c0_i32_0 = arith.constant 0 : i32
    %c0_i32_1 = arith.constant 0 : i32
    return %c0_i32, %c0_i32_0 : i32, i32
  }
  func.func @transform_6(%arg0: i32) -> (i32, i32) {
    %c0_i32 = arith.constant 0 : i32
    %c0_i32_0 = arith.constant 0 : i32
    %c0_i32_1 = arith.constant 0 : i32
    return %c0_i32, %c0_i32_0 : i32, i32
  }
  func.func @transform_7(%arg0: i32) -> (i32, i32) {
    %c0_i32 = arith.constant 0 : i32
    %c0_i32_0 = arith.constant 0 : i32
    %c0_i32_1 = arith.constant 0 : i32
    return %c0_i32, %c0_i32_0 : i32, i32
  }
  func.func @transform_8(%arg0: i32) -> (i32, i32) {
    %c0_i32 = arith.constant 0 : i32
    %c0_i32_0 = arith.constant 0 : i32
    %c0_i32_1 = arith.constant 0 : i32
    return %c0_i32, %c0_i32_0 : i32, i32
  }
  func.func @transform_9(%arg0: i32) -> (i32, i32) {
    %c0_i32 = arith.constant 0 : i32
    %c0_i32_0 = arith.constant 0 : i32
    %c0_i32_1 = arith.constant 0 : i32
    return %c0_i32, %c0_i32_0 : i32, i32
  }
  func.func @transform_10(%arg0: i32) -> (i32, i32) {
    %c0_i32 = arith.constant 0 : i32
    %c0_i32_0 = arith.constant 0 : i32
    %c0_i32_1 = arith.constant 0 : i32
    return %c0_i32, %c0_i32_0 : i32, i32
  }
  func.func @transform_11(%arg0: i32) -> (i32, i32) {
    %c0_i32 = arith.constant 0 : i32
    %c0_i32_0 = arith.constant 0 : i32
    return %arg0, %c0_i32 : i32, i32
  }
}

</mosaic_0001>

<llo_original>
// kernel: _value_forward.1
$region0: #{_value_forward.1}
  #allocation0 [shape = 'u32[]', space=smem, size = 0x4, offset = 0x4, fixed_abs, tag = 'smem constant byte address 0x4 - core index']
  #allocation1 [shape = 'u32[144,128]{1,0:T(1,128)}', space=vmem, size = 0x12000, scoped, tag = 'internal scratch']
  #allocation2 [shape = 'f32[1,1]{1,0:T(1,128)S(1)}', space=vmem, size = 0x200, scoped, tag = 'scoped memory for _value_forward.1']
  %s0 = inlined_call_operand.vmem [shape: f32[40,128], index: 0, kind: input, shape index: {}]
  %s1 = inlined_call_operand.vmem [shape: bf16[128,256], index: 1, kind: input, shape index: {}]
  %s2 = inlined_call_operand.vmem [shape: f32[1,256], index: 2, kind: input, shape index: {}]
  %s3 = inlined_call_operand.vmem [shape: f32[1,256], index: 3, kind: input, shape index: {}]
  %s4 = inlined_call_operand.vmem [shape: f32[1,256], index: 4, kind: input, shape index: {}]
  %s5 = inlined_call_operand.vmem [shape: bf16[256,256], index: 5, kind: input, shape index: {}]
  %s6 = inlined_call_operand.vmem [shape: f32[1,256], index: 6, kind: input, shape index: {}]
  %s7 = inlined_call_operand.vmem [shape: f32[1,256], index: 7, kind: input, shape index: {}]
  %s8 = inlined_call_operand.vmem [shape: f32[1,256], index: 8, kind: input, shape index: {}]
  %s9 = inlined_call_operand.vmem [shape: f32[1,256], index: 9, kind: input, shape index: {}]
  %s10 = inlined_call_operand.<no memory space> [shape: f32[1,1], index: 10, kind: input, shape index: {}]
  %s11 = inlined_call_operand.vmem [shape: f32[40,1], index: 11, kind: output, shape index: {}]
  %s12 = sld [smem:[#allocation0]]
  $region54: #{_value_forward.1} parent=0
    _
  %s14 = ssub.s32 1, %s12
  %s15 = scalar_select 0, %s14, %s12
  %v16 = vstv %s10
  %17 = vst [vmem:[#allocation2] sm:$0x1] %v16
  // Predicated region
  $region2: #{_value_forward.1} parent=0 // pred_check
    _
  $region3: #{_value_forward.1} parent=0 // pred_check_branch
    %19 = sbr.rel (0) target = $region5
  $region4: #{_value_forward.1} parent=0 // pred_region
    _
  $region5: #{_value_forward.1} parent=0 // pred_fallthru
    _
  // Predicated region
  $region6: #{_value_forward.1} parent=0 // pred_check
    _
  $region7: #{_value_forward.1} parent=0 // pred_check_branch
    %21 = sbr.rel (0) target = $region9
  $region8: #{_value_forward.1} parent=0 // pred_region
    _
  $region9: #{_value_forward.1} parent=0 // pred_fallthru
    _
  // Predicated region
  $region10: #{_value_forward.1} parent=0 // pred_check
    _
  $region11: #{_value_forward.1} parent=0 // pred_check_branch
    %23 = sbr.rel (0) target = $region13
  $region12: #{_value_forward.1} parent=0 // pred_region
    _
  $region13: #{_value_forward.1} parent=0 // pred_fallthru
    _
  // Predicated region
  $region14: #{_value_forward.1} parent=0 // pred_check
    _
  $region15: #{_value_forward.1} parent=0 // pred_check_branch
    %25 = sbr.rel (0) target = $region17
  $region16: #{_value_forward.1} parent=0 // pred_region
    _
  $region17: #{_value_forward.1} parent=0 // pred_fallthru
    _
  // Predicated region
  $region18: #{_value_forward.1} parent=0 // pred_check
    _
  $region19: #{_value_forward.1} parent=0 // pred_check_branch
    %27 = sbr.rel (0) target = $region21
  $region20: #{_value_forward.1} parent=0 // pred_region
    _
  $region21: #{_value_forward.1} parent=0 // pred_fallthru
    _
  // Predicated region
  $region22: #{_value_forward.1} parent=0 // pred_check
    _
  $region23: #{_value_forward.1} parent=0 // pred_check_branch
    %29 = sbr.rel (0) target = $region25
  $region24: #{_value_forward.1} parent=0 // pred_region
    _
  $region25: #{_value_forward.1} parent=0 // pred_fallthru
    _
  // Predicated region
  $region26: #{_value_forward.1} parent=0 // pred_check
    _
  $region27: #{_value_forward.1} parent=0 // pred_check_branch
    %31 = sbr.rel (0) target = $region29
  $region28: #{_value_forward.1} parent=0 // pred_region
    _
  $region29: #{_value_forward.1} parent=0 // pred_fallthru
    _
  // Predicated region
  $region30: #{_value_forward.1} parent=0 // pred_check
    _
  $region31: #{_value_forward.1} parent=0 // pred_check_branch
    %33 = sbr.rel (0) target = $region33
  $region32: #{_value_forward.1} parent=0 // pred_region
    _
  $region33: #{_value_forward.1} parent=0 // pred_fallthru
    _
  // Predicated region
  $region34: #{_value_forward.1} parent=0 // pred_check
    _
  $region35: #{_value_forward.1} parent=0 // pred_check_branch
    %35 = sbr.rel (0) target = $region37
  $region36: #{_value_forward.1} parent=0 // pred_region
    _
  $region37: #{_value_forward.1} parent=0 // pred_fallthru
    _
  // Predicated region
  $region38: #{_value_forward.1} parent=0 // pred_check
    _
  $region39: #{_value_forward.1} parent=0 // pred_check_branch
    %37 = sbr.rel (0) target = $region41
  $region40: #{_value_forward.1} parent=0 // pred_region
    _
  $region41: #{_value_forward.1} parent=0 // pred_fallthru
    _
  // Predicated region
  $region42: #{_value_forward.1} parent=0 // pred_check
    _
  $region43: #{_value_forward.1} parent=0 // pred_check_branch
    %39 = sbr.rel (0) target = $region45
  $region44: #{_value_forward.1} parent=0 // pred_region
    _
  $region45: #{_value_forward.1} parent=0 // pred_fallthru
    _
  %v41 = vld [vmem:[%s0] sm:$0xff]
  %v42 = vld [vmem:[%s0 + $0x8] sm:$0xff]
  %v43 = vld [vmem:[%s0 + $0x10] sm:$0xff]
  %v44 = vld [vmem:[%s0 + $0x18] sm:$0xff]
  %v45 = vld [vmem:[%s0 + $0x20] sm:$0xff]
  %v46 = vpack.c.bf16 %v42, %v41
  %v47 = vpack.c.bf16 %v44, %v43
  %v48 = vpack.c.bf16 %v45, %v45
  %v49 = vld [vmem:[%s1] sm:$0xff]
  %v50 = vld [vmem:[%s1 + $0x8] sm:$0xff]
  %v51 = vld [vmem:[%s1 + $0x10] sm:$0xff]
  %v52 = vld [vmem:[%s1 + $0x18] sm:$0xff]
  %v53 = vld [vmem:[%s1 + $0x20] sm:$0xff]
  %v54 = vld [vmem:[%s1 + $0x28] sm:$0xff]
  %v55 = vld [vmem:[%s1 + $0x30] sm:$0xff]
  %v56 = vld [vmem:[%s1 + $0x38] sm:$0xff]
  %v57 = vld [vmem:[%s1 + $0x40] sm:$0xff]
  %v58 = vld [vmem:[%s1 + $0x48] sm:$0xff]
  %v59 = vld [vmem:[%s1 + $0x50] sm:$0xff]
  %v60 = vld [vmem:[%s1 + $0x58] sm:$0xff]
  %v61 = vld [vmem:[%s1 + $0x60] sm:$0xff]
  %v62 = vld [vmem:[%s1 + $0x68] sm:$0xff]
  %v63 = vld [vmem:[%s1 + $0x70] sm:$0xff]
  %v64 = vld [vmem:[%s1 + $0x78] sm:$0xff]
  %v65 = vld [vmem:[%s2] sm:$0x3]
  %v67 = vlaneseq
  %v68 = vshrl.u32 %v67, 7
  %v69 = vsub.s32 0, %v68
  %v70 = vrot.slane %v65, %v69
  %v71 = vlaneseq
  %v72 = vshrl.u32 %v71, 7
  %v73 = vsub.s32 1, %v72
  %v74 = vrot.slane %v65, %v73
  %v93 = vunpack.c.l.b16 %v49
  %v94 = vunpack.c.h.b16 %v49
  %v95 = vunpack.c.l.b16 %v50
  %v96 = vunpack.c.h.b16 %v50
  %v97 = vunpack.c.l.b16 %v51
  %v98 = vunpack.c.h.b16 %v51
  %v99 = vunpack.c.l.b16 %v52
  %v100 = vunpack.c.h.b16 %v52
  %v101 = vunpack.c.l.b16 %v53
  %v102 = vunpack.c.h.b16 %v53
  %v103 = vunpack.c.l.b16 %v54
  %v104 = vunpack.c.h.b16 %v54
  %v105 = vunpack.c.l.b16 %v55
  %v106 = vunpack.c.h.b16 %v55
  %v107 = vunpack.c.l.b16 %v56
  %v108 = vunpack.c.h.b16 %v56
  %v109 = vunpack.c.l.b16 %v57
  %v110 = vunpack.c.h.b16 %v57
  %v111 = vunpack.c.l.b16 %v58
  %v112 = vunpack.c.h.b16 %v58
  %v113 = vunpack.c.l.b16 %v59
  %v114 = vunpack.c.h.b16 %v59
  %v115 = vunpack.c.l.b16 %v60
  %v116 = vunpack.c.h.b16 %v60
  %v117 = vunpack.c.l.b16 %v61
  %v118 = vunpack.c.h.b16 %v61
  %v119 = vunpack.c.l.b16 %v62
  %v120 = vunpack.c.h.b16 %v62
  %v121 = vunpack.c.l.b16 %v63
  %v122 = vunpack.c.h.b16 %v63
  %v123 = vunpack.c.l.b16 %v64
  %v124 = vunpack.c.h.b16 %v64
  %v125 = vpack.c.b16 %v95, %v93
  %v126 = vpack.c.b16 %v96, %v94
  %v127 = vpack.c.b16 %v99, %v97
  %v128 = vpack.c.b16 %v100, %v98
  %v129 = vpack.c.b16 %v103, %v101
  %v130 = vpack.c.b16 %v104, %v102
  %v131 = vpack.c.b16 %v107, %v105
  %v132 = vpack.c.b16 %v108, %v106
  %v133 = vpack.c.b16 %v111, %v109
  %v134 = vpack.c.b16 %v112, %v110
  %v135 = vpack.c.b16 %v115, %v113
  %v136 = vpack.c.b16 %v116, %v114
  %v137 = vpack.c.b16 %v119, %v117
  %v138 = vpack.c.b16 %v120, %v118
  %v139 = vpack.c.b16 %v123, %v121
  %v140 = vpack.c.b16 %v124, %v122
  %157 = vmatprep.subr.bf16.mxu0 %v126
  %158 = vmatpush1.bf16.msra.mxu0 %v125
  %159 = vmatprep.subr.bf16.mxu0 %v128
  %160 = vmatpush1.bf16.msra.mxu0 %v127
  %161 = vmatprep.subr.bf16.mxu0 %v130
  %162 = vmatpush1.bf16.msra.mxu0 %v129
  %163 = vmatprep.subr.bf16.mxu0 %v132
  %164 = vmatpush1.bf16.msra.mxu0 %v131
  %165 = vmatprep.subr.bf16.mxu0 %v134
  %166 = vmatpush1.bf16.msra.mxu0 %v133
  %167 = vmatprep.subr.bf16.mxu0 %v136
  %168 = vmatpush1.bf16.msra.mxu0 %v135
  %169 = vmatprep.subr.bf16.mxu0 %v138
  %170 = vmatpush1.bf16.msra.mxu0 %v137
  %171 = vmatprep.subr.bf16.mxu0 %v140
  %172 = vmatpush1.bf16.msra.mxu0 %v139
  %173 = vmatprep.subr.bf16.mxu0 0
  %174 = vmatpush1.bf16.msra.mxu0 0
  %175 = vmatprep.subr.bf16.mxu0 0
  %176 = vmatpush1.bf16.msra.mxu0 0
  %177 = vmatprep.subr.bf16.mxu0 0
  %178 = vmatpush1.bf16.msra.mxu0 0
  %179 = vmatprep.subr.bf16.mxu0 0
  %180 = vmatpush1.bf16.msra.mxu0 0
  %181 = vmatprep.subr.bf16.mxu0 0
  %182 = vmatpush1.bf16.msra.mxu0 0
  %183 = vmatprep.subr.bf16.mxu0 0
  %184 = vmatpush1.bf16.msra.mxu0 0
  %185 = vmatprep.subr.bf16.mxu0 0
  %186 = vmatpush1.bf16.msra.mxu0 0
  %187 = vmatprep.subr.bf16.mxu0 0
  %188 = vmatpush1.bf16.msra.mxu0 0
  %189 = vmatprep.mubr.bf16.mxu0 0
  %190 = vmatmul.mubr.bf16.gmra.mrb[0].mxu0 %v46
  %v191 = vpop.f32.mrb[0].mxu0
  %v192 = vadd.f32 %v70, %v191
  %v193 = vpop.f32.mrb[0].mxu0
  %v194 = vadd.f32 %v74, %v193
  %v195 = vpop.f32.mrb[0].mxu0
  %v196 = vadd.f32 %v70, %v195
  %v197 = vpop.f32.mrb[0].mxu0
  %v198 = vadd.f32 %v74, %v197
  %199 = vmatprep.mubr.bf16.mxu0 0
  %200 = vmatmul.mubr.bf16.gmra.mrb[0].mxu0 %v47
  %v201 = vpop.f32.mrb[0].mxu0
  %v202 = vadd.f32 %v70, %v201
  %v203 = vpop.f32.mrb[0].mxu0
  %v204 = vadd.f32 %v74, %v203
  %v205 = vpop.f32.mrb[0].mxu0
  %v206 = vadd.f32 %v70, %v205
  %v207 = vpop.f32.mrb[0].mxu0
  %v208 = vadd.f32 %v74, %v207
  %209 = vmatprep.mubr.bf16.mxu0 0
  %210 = vmatmul.mubr.bf16.gmra.mrb[0].mxu0 %v48
  %v211 = vpop.f32.mrb[0].mxu0
  %v212 = vadd.f32 %v70, %v211
  %v213 = vpop.f32.mrb[0].mxu0
  %v214 = vadd.f32 %v74, %v213
  %v215 = vpop.f32.mrb[0].mxu0
  %v216 = vpop.f32.mrb[0].mxu0
  %217 = vdwg.mxu0
  %v218 = vmax.f32 %v192, 0.0
  %v219 = vmax.f32 %v194, 0.0
  %v220 = vmax.f32 %v196, 0.0
  %v221 = vmax.f32 %v198, 0.0
  %v222 = vmax.f32 %v202, 0.0
  %v223 = vmax.f32 %v204, 0.0
  %v224 = vmax.f32 %v206, 0.0
  %v225 = vmax.f32 %v208, 0.0
  %v226 = vmax.f32 %v212, 0.0
  %v227 = vmax.f32 %v214, 0.0
  %v228 = vadd.f32 %v218, %v219
  %229 = vadd.xlane.f32.xlu0 %v228
  %v230 = vpop.xlane.xlu0 %229
  %v231 = vadd.f32 %v220, %v221
  %232 = vadd.xlane.f32.xlu0 %v231
  %v233 = vpop.xlane.xlu0 %232
  %v234 = vadd.f32 %v222, %v223
  %235 = vadd.xlane.f32.xlu0 %v234
  %v236 = vpop.xlane.xlu0 %235
  %v237 = vadd.f32 %v224, %v225
  %238 = vadd.xlane.f32.xlu0 %v237
  %v239 = vpop.xlane.xlu0 %238
  %v240 = vadd.f32 %v226, %v227
  %241 = vadd.xlane.f32.xlu0 %v240
  %v242 = vpop.xlane.xlu0 %241
  %v243 = vrcp.pop 256.0
  %v244 = vmul.f32 %v230, %v243
  %v245 = vmul.f32 %v233, %v243
  %v246 = vmul.f32 %v236, %v243
  %v247 = vmul.f32 %v239, %v243
  %v248 = vmul.f32 %v242, %v243
  %v249 = vmul.f32 %v218, %v218
  %v250 = vmul.f32 %v219, %v219
  %v251 = vmul.f32 %v220, %v220
  %v252 = vmul.f32 %v221, %v221
  %v253 = vmul.f32 %v222, %v222
  %v254 = vmul.f32 %v223, %v223
  %v255 = vmul.f32 %v224, %v224
  %v256 = vmul.f32 %v225, %v225
  %v257 = vmul.f32 %v226, %v226
  %v258 = vmul.f32 %v227, %v227
  %v259 = vadd.f32 %v249, %v250
  %260 = vadd.xlane.f32.xlu0 %v259
  %v261 = vpop.xlane.xlu0 %260
  %v262 = vadd.f32 %v251, %v252
  %263 = vadd.xlane.f32.xlu0 %v262
  %v264 = vpop.xlane.xlu0 %263
  %v265 = vadd.f32 %v253, %v254
  %266 = vadd.xlane.f32.xlu0 %v265
  %v267 = vpop.xlane.xlu0 %266
  %v268 = vadd.f32 %v255, %v256
  %269 = vadd.xlane.f32.xlu0 %v268
  %v270 = vpop.xlane.xlu0 %269
  %v271 = vadd.f32 %v257, %v258
  %272 = vadd.xlane.f32.xlu0 %v271
  %v273 = vpop.xlane.xlu0 %272
  %v274 = vmul.f32 %v261, %v243
  %v275 = vmul.f32 %v264, %v243
  %v276 = vmul.f32 %v267, %v243
  %v277 = vmul.f32 %v270, %v243
  %v278 = vmul.f32 %v273, %v243
  %v279 = vmul.f32 %v244, %v244
  %v280 = vmul.f32 %v245, %v245
  %v281 = vmul.f32 %v246, %v246
  %v282 = vmul.f32 %v247, %v247
  %v283 = vmul.f32 %v248, %v248
  %v284 = vsub.f32 %v274, %v279
  %v285 = vsub.f32 %v275, %v280
  %v286 = vsub.f32 %v276, %v281
  %v287 = vsub.f32 %v277, %v282
  %v288 = vsub.f32 %v278, %v283
  %v289 = vmax.f32 %v284, 0.0
  %v290 = vmax.f32 %v285, 0.0
  %v291 = vmax.f32 %v286, 0.0
  %v292 = vmax.f32 %v287, 0.0
  %v293 = vmax.f32 %v288, 0.0
  %v294 = vsub.f32 %v218, %v244
  %v295 = vsub.f32 %v219, %v244
  %v296 = vsub.f32 %v220, %v245
  %v297 = vsub.f32 %v221, %v245
  %v298 = vsub.f32 %v222, %v246
  %v299 = vsub.f32 %v223, %v246
  %v300 = vsub.f32 %v224, %v247
  %v301 = vsub.f32 %v225, %v247
  %v302 = vsub.f32 %v226, %v248
  %v303 = vsub.f32 %v227, %v248
  %v304 = vadd.f32 %v289, 1e-05
  %v305 = vadd.f32 %v290, 1e-05
  %v306 = vadd.f32 %v291, 1e-05
  %v307 = vadd.f32 %v292, 1e-05
  %v308 = vadd.f32 %v293, 1e-05
  %v309 = vrsqrt.pop %v304
  %v310 = vrsqrt.pop %v305
  %v311 = vrsqrt.pop %v306
  %v312 = vrsqrt.pop %v307
  %v313 = vrsqrt.pop %v308
  %v314 = vmul.f32 %v294, %v309
  %v315 = vmul.f32 %v295, %v309
  %v316 = vmul.f32 %v296, %v310
  %v317 = vmul.f32 %v297, %v310
  %v318 = vmul.f32 %v298, %v311
  %v319 = vmul.f32 %v299, %v311
  %v320 = vmul.f32 %v300, %v312
  %v321 = vmul.f32 %v301, %v312
  %v322 = vmul.f32 %v302, %v313
  %v323 = vmul.f32 %v303, %v313
  %v324 = vld [vmem:[%s3] sm:$0x3]
  %v326 = vlaneseq
  %v327 = vshrl.u32 %v326, 7
  %v328 = vsub.s32 0, %v327
  %v329 = vrot.slane %v324, %v328
  %v330 = vlaneseq
  %v331 = vshrl.u32 %v330, 7
  %v332 = vsub.s32 1, %v331
  %v333 = vrot.slane %v324, %v332
  %v336 = vmul.f32 %v314, %v329
  %v337 = vmul.f32 %v315, %v333
  %v338 = vmul.f32 %v316, %v329
  %v339 = vmul.f32 %v317, %v333
  %v340 = vmul.f32 %v318, %v329
  %v341 = vmul.f32 %v319, %v333
  %v342 = vmul.f32 %v320, %v329
  %v343 = vmul.f32 %v321, %v333
  %v344 = vmul.f32 %v322, %v329
  %v345 = vmul.f32 %v323, %v333
  %v346 = vld [vmem:[%s4] sm:$0x3]
  %v348 = vlaneseq
  %v349 = vshrl.u32 %v348, 7
  %v350 = vsub.s32 0, %v349
  %v351 = vrot.slane %v346, %v350
  %v352 = vlaneseq
  %v353 = vshrl.u32 %v352, 7
  %v354 = vsub.s32 1, %v353
  %v355 = vrot.slane %v346, %v354
  %v358 = vadd.f32 %v336, %v351
  %v359 = vadd.f32 %v337, %v355
  %v360 = vadd.f32 %v338, %v351
  %v361 = vadd.f32 %v339, %v355
  %v362 = vadd.f32 %v340, %v351
  %v363 = vadd.f32 %v341, %v355
  %v364 = vadd.f32 %v342, %v351
  %v365 = vadd.f32 %v343, %v355
  %v366 = vadd.f32 %v344, %v351
  %v367 = vadd.f32 %v345, %v355
  %v368 = vpack.c.bf16 %v360, %v358
  %v369 = vpack.c.bf16 %v361, %v359
  %v370 = vpack.c.bf16 %v364, %v362
  %v371 = vpack.c.bf16 %v365, %v363
  %v372 = vpack.c.bf16 %v366, %v366
  %v373 = vpack.c.bf16 %v367, %v367
  %v374 = vld [vmem:[%s5] sm:$0xff]
  %v375 = vld [vmem:[%s5 + $0x8] sm:$0xff]
  %v376 = vld [vmem:[%s5 + $0x10] sm:$0xff]
  %v377 = vld [vmem:[%s5 + $0x18] sm:$0xff]
  %v378 = vld [vmem:[%s5 + $0x20] sm:$0xff]
  %v379 = vld [vmem:[%s5 + $0x28] sm:$0xff]
  %v380 = vld [vmem:[%s5 + $0x30] sm:$0xff]
  %v381 = vld [vmem:[%s5 + $0x38] sm:$0xff]
  %v382 = vld [vmem:[%s5 + $0x40] sm:$0xff]
  %v383 = vld [vmem:[%s5 + $0x48] sm:$0xff]
  %v384 = vld [vmem:[%s5 + $0x50] sm:$0xff]
  %v385 = vld [vmem:[%s5 + $0x58] sm:$0xff]
  %v386 = vld [vmem:[%s5 + $0x60] sm:$0xff]
  %v387 = vld [vmem:[%s5 + $0x68] sm:$0xff]
  %v388 = vld [vmem:[%s5 + $0x70] sm:$0xff]
  %v389 = vld [vmem:[%s5 + $0x78] sm:$0xff]
  %v390 = vld [vmem:[%s5 + $0x80] sm:$0xff]
  %v391 = vld [vmem:[%s5 + $0x88] sm:$0xff]
  %v392 = vld [vmem:[%s5 + $0x90] sm:$0xff]
  %v393 = vld [vmem:[%s5 + $0x98] sm:$0xff]
  %v394 = vld [vmem:[%s5 + $0xa0] sm:$0xff]
  %v395 = vld [vmem:[%s5 + $0xa8] sm:$0xff]
  %v396 = vld [vmem:[%s5 + $0xb0] sm:$0xff]
  %v397 = vld [vmem:[%s5 + $0xb8] sm:$0xff]
  %v398 = vld [vmem:[%s5 + $0xc0] sm:$0xff]
  %v399 = vld [vmem:[%s5 + $0xc8] sm:$0xff]
  %v400 = vld [vmem:[%s5 + $0xd0] sm:$0xff]
  %v401 = vld [vmem:[%s5 + $0xd8] sm:$0xff]
  %v402 = vld [vmem:[%s5 + $0xe0] sm:$0xff]
  %v403 = vld [vmem:[%s5 + $0xe8] sm:$0xff]
  %v404 = vld [vmem:[%s5 + $0xf0] sm:$0xff]
  %v405 = vld [vmem:[%s5 + $0xf8] sm:$0xff]
  %v406 = vld [vmem:[%s6] sm:$0x3]
  %v408 = vlaneseq
  %v409 = vshrl.u32 %v408, 7
  %v410 = vsub.s32 0, %v409
  %v411 = vrot.slane %v406, %v410
  %v412 = vlaneseq
  %v413 = vshrl.u32 %v412, 7
  %v414 = vsub.s32 1, %v413
  %v415 = vrot.slane %v406, %v414
  %v450 = vunpack.c.l.b16 %v374
  %v451 = vunpack.c.h.b16 %v374
  %v452 = vunpack.c.l.b16 %v375
  %v453 = vunpack.c.h.b16 %v375
  %v454 = vunpack.c.l.b16 %v376
  %v455 = vunpack.c.h.b16 %v376
  %v456 = vunpack.c.l.b16 %v377
  %v457 = vunpack.c.h.b16 %v377
  %v458 = vunpack.c.l.b16 %v378
  %v459 = vunpack.c.h.b16 %v378
  %v460 = vunpack.c.l.b16 %v379
  %v461 = vunpack.c.h.b16 %v379
  %v462 = vunpack.c.l.b16 %v380
  %v463 = vunpack.c.h.b16 %v380
  %v464 = vunpack.c.l.b16 %v381
  %v465 = vunpack.c.h.b16 %v381
  %v466 = vunpack.c.l.b16 %v382
  %v467 = vunpack.c.h.b16 %v382
  %v468 = vunpack.c.l.b16 %v383
  %v469 = vunpack.c.h.b16 %v383
  %v470 = vunpack.c.l.b16 %v384
  %v471 = vunpack.c.h.b16 %v384
  %v472 = vunpack.c.l.b16 %v385
  %v473 = vunpack.c.h.b16 %v385
  %v474 = vunpack.c.l.b16 %v386
  %v475 = vunpack.c.h.b16 %v386
  %v476 = vunpack.c.l.b16 %v387
  %v477 = vunpack.c.h.b16 %v387
  %v478 = vunpack.c.l.b16 %v388
  %v479 = vunpack.c.h.b16 %v388
  %v480 = vunpack.c.l.b16 %v389
  %v481 = vunpack.c.h.b16 %v389
  %v482 = vunpack.c.l.b16 %v390
  %v483 = vunpack.c.h.b16 %v390
  %v484 = vunpack.c.l.b16 %v391
  %v485 = vunpack.c.h.b16 %v391
  %v486 = vunpack.c.l.b16 %v392
  %v487 = vunpack.c.h.b16 %v392
  %v488 = vunpack.c.l.b16 %v393
  %v489 = vunpack.c.h.b16 %v393
  %v490 = vunpack.c.l.b16 %v394
  %v491 = vunpack.c.h.b16 %v394
  %v492 = vunpack.c.l.b16 %v395
  %v493 = vunpack.c.h.b16 %v395
  %v494 = vunpack.c.l.b16 %v396
  %v495 = vunpack.c.h.b16 %v396
  %v496 = vunpack.c.l.b16 %v397
  %v497 = vunpack.c.h.b16 %v397
  %v498 = vunpack.c.l.b16 %v398
  %v499 = vunpack.c.h.b16 %v398
  %v500 = vunpack.c.l.b16 %v399
  %v501 = vunpack.c.h.b16 %v399
  %v502 = vunpack.c.l.b16 %v400
  %v503 = vunpack.c.h.b16 %v400
  %v504 = vunpack.c.l.b16 %v401
  %v505 = vunpack.c.h.b16 %v401
  %v506 = vunpack.c.l.b16 %v402
  %v507 = vunpack.c.h.b16 %v402
  %v508 = vunpack.c.l.b16 %v403
  %v509 = vunpack.c.h.b16 %v403
  %v510 = vunpack.c.l.b16 %v404
  %v511 = vunpack.c.h.b16 %v404
  %v512 = vunpack.c.l.b16 %v405
  %v513 = vunpack.c.h.b16 %v405
  %v514 = vpack.c.b16 %v452, %v450
  %v515 = vpack.c.b16 %v453, %v451
  %v516 = vpack.c.b16 %v456, %v454
  %v517 = vpack.c.b16 %v457, %v455
  %v518 = vpack.c.b16 %v460, %v458
  %v519 = vpack.c.b16 %v461, %v459
  %v520 = vpack.c.b16 %v464, %v462
  %v521 = vpack.c.b16 %v465, %v463
  %v522 = vpack.c.b16 %v468, %v466
  %v523 = vpack.c.b16 %v469, %v467
  %v524 = vpack.c.b16 %v472, %v470
  %v525 = vpack.c.b16 %v473, %v471
  %v526 = vpack.c.b16 %v476, %v474
  %v527 = vpack.c.b16 %v477, %v475
  %v528 = vpack.c.b16 %v480, %v478
  %v529 = vpack.c.b16 %v481, %v479
  %v530 = vpack.c.b16 %v484, %v482
  %v531 = vpack.c.b16 %v485, %v483
  %v532 = vpack.c.b16 %v488, %v486
  %v533 = vpack.c.b16 %v489, %v487
  %v534 = vpack.c.b16 %v492, %v490
  %v535 = vpack.c.b16 %v493, %v491
  %v536 = vpack.c.b16 %v496, %v494
  %v537 = vpack.c.b16 %v497, %v495
  %v538 = vpack.c.b16 %v500, %v498
  %v539 = vpack.c.b16 %v501, %v499
  %v540 = vpack.c.b16 %v504, %v502
  %v541 = vpack.c.b16 %v505, %v503
  %v542 = vpack.c.b16 %v508, %v506
  %v543 = vpack.c.b16 %v509, %v507
  %v544 = vpack.c.b16 %v512, %v510
  %v545 = vpack.c.b16 %v513, %v511
  %578 = vmatprep.subr.bf16.mxu0 %v515
  %579 = vmatpush1.bf16.msra.mxu0 %v514
  %580 = vmatprep.subr.bf16.mxu0 %v517
  %581 = vmatpush1.bf16.msra.mxu0 %v516
  %582 = vmatprep.subr.bf16.mxu0 %v519
  %583 = vmatpush1.bf16.msra.mxu0 %v518
  %584 = vmatprep.subr.bf16.mxu0 %v521
  %585 = vmatpush1.bf16.msra.mxu0 %v520
  %586 = vmatprep.subr.bf16.mxu0 %v523
  %587 = vmatpush1.bf16.msra.mxu0 %v522
  %588 = vmatprep.subr.bf16.mxu0 %v525
  %589 = vmatpush1.bf16.msra.mxu0 %v524
  %590 = vmatprep.subr.bf16.mxu0 %v527
  %591 = vmatpush1.bf16.msra.mxu0 %v526
  %592 = vmatprep.subr.bf16.mxu0 %v529
  %593 = vmatpush1.bf16.msra.mxu0 %v528
  %594 = vmatprep.subr.bf16.mxu0 %v531
  %595 = vmatpush1.bf16.msra.mxu0 %v530
  %596 = vmatprep.subr.bf16.mxu0 %v533
  %597 = vmatpush1.bf16.msra.mxu0 %v532
  %598 = vmatprep.subr.bf16.mxu0 %v535
  %599 = vmatpush1.bf16.msra.mxu0 %v534
  %600 = vmatprep.subr.bf16.mxu0 %v537
  %601 = vmatpush1.bf16.msra.mxu0 %v536
  %602 = vmatprep.subr.bf16.mxu0 %v539
  %603 = vmatpush1.bf16.msra.mxu0 %v538
  %604 = vmatprep.subr.bf16.mxu0 %v541
  %605 = vmatpush1.bf16.msra.mxu0 %v540
  %606 = vmatprep.subr.bf16.mxu0 %v543
  %607 = vmatpush1.bf16.msra.mxu0 %v542
  %608 = vmatprep.subr.bf16.mxu0 %v545
  %609 = vmatpush1.bf16.msra.mxu0 %v544
  %610 = vmatprep.mubr.bf16.mxu0 %v369
  %611 = vmatmul.mubr.bf16.gmra.mrb[0].mxu0 %v368
  %v612 = vpop.f32.mrb[0].mxu0
  %v613 = vadd.f32 %v411, %v612
  %v614 = vpop.f32.mrb[0].mxu0
  %v615 = vadd.f32 %v415, %v614
  %v616 = vpop.f32.mrb[0].mxu0
  %v617 = vadd.f32 %v411, %v616
  %v618 = vpop.f32.mrb[0].mxu0
  %v619 = vadd.f32 %v415, %v618
  %620 = vmatprep.mubr.bf16.mxu0 %v371
  %621 = vmatmul.mubr.bf16.gmra.mrb[0].mxu0 %v370
  %v622 = vpop.f32.mrb[0].mxu0
  %v623 = vadd.f32 %v411, %v622
  %v624 = vpop.f32.mrb[0].mxu0
  %v625 = vadd.f32 %v415, %v624
  %v626 = vpop.f32.mrb[0].mxu0
  %v627 = vadd.f32 %v411, %v626
  %v628 = vpop.f32.mrb[0].mxu0
  %v629 = vadd.f32 %v415, %v628
  %630 = vmatprep.mubr.bf16.mxu0 %v373
  %631 = vmatmul.mubr.bf16.gmra.mrb[0].mxu0 %v372
  %v632 = vpop.f32.mrb[0].mxu0
  %v633 = vadd.f32 %v411, %v632
  %v634 = vpop.f32.mrb[0].mxu0
  %v635 = vadd.f32 %v415, %v634
  %v636 = vpop.f32.mrb[0].mxu0
  %v637 = vpop.f32.mrb[0].mxu0
  %638 = vdwg.mxu0
  %v639 = vmax.f32 %v613, 0.0
  %v640 = vmax.f32 %v615, 0.0
  %v641 = vmax.f32 %v617, 0.0
  %v642 = vmax.f32 %v619, 0.0
  %v643 = vmax.f32 %v623, 0.0
  %v644 = vmax.f32 %v625, 0.0
  %v645 = vmax.f32 %v627, 0.0
  %v646 = vmax.f32 %v629, 0.0
  %v647 = vmax.f32 %v633, 0.0
  %v648 = vmax.f32 %v635, 0.0
  %v649 = vadd.f32 %v639, %v640
  %650 = vadd.xlane.f32.xlu0 %v649
  %v651 = vpop.xlane.xlu0 %650
  %v652 = vadd.f32 %v641, %v642
  %653 = vadd.xlane.f32.xlu0 %v652
  %v654 = vpop.xlane.xlu0 %653
  %v655 = vadd.f32 %v643, %v644
  %656 = vadd.xlane.f32.xlu0 %v655
  %v657 = vpop.xlane.xlu0 %656
  %v658 = vadd.f32 %v645, %v646
  %659 = vadd.xlane.f32.xlu0 %v658
  %v660 = vpop.xlane.xlu0 %659
  %v661 = vadd.f32 %v647, %v648
  %662 = vadd.xlane.f32.xlu0 %v661
  %v663 = vpop.xlane.xlu0 %662
  %v664 = vmul.f32 %v651, %v243
  %v665 = vmul.f32 %v654, %v243
  %v666 = vmul.f32 %v657, %v243
  %v667 = vmul.f32 %v660, %v243
  %v668 = vmul.f32 %v663, %v243
  %v669 = vmul.f32 %v639, %v639
  %v670 = vmul.f32 %v640, %v640
  %v671 = vmul.f32 %v641, %v641
  %v672 = vmul.f32 %v642, %v642
  %v673 = vmul.f32 %v643, %v643
  %v674 = vmul.f32 %v644, %v644
  %v675 = vmul.f32 %v645, %v645
  %v676 = vmul.f32 %v646, %v646
  %v677 = vmul.f32 %v647, %v647
  %v678 = vmul.f32 %v648, %v648
  %v679 = vadd.f32 %v669, %v670
  %680 = vadd.xlane.f32.xlu0 %v679
  %v681 = vpop.xlane.xlu0 %680
  %v682 = vadd.f32 %v671, %v672
  %683 = vadd.xlane.f32.xlu0 %v682
  %v684 = vpop.xlane.xlu0 %683
  %v685 = vadd.f32 %v673, %v674
  %686 = vadd.xlane.f32.xlu0 %v685
  %v687 = vpop.xlane.xlu0 %686
  %v688 = vadd.f32 %v675, %v676
  %689 = vadd.xlane.f32.xlu0 %v688
  %v690 = vpop.xlane.xlu0 %689
  %v691 = vadd.f32 %v677, %v678
  %692 = vadd.xlane.f32.xlu0 %v691
  %v693 = vpop.xlane.xlu0 %692
  %v694 = vmul.f32 %v681, %v243
  %v695 = vmul.f32 %v684, %v243
  %v696 = vmul.f32 %v687, %v243
  %v697 = vmul.f32 %v690, %v243
  %v698 = vmul.f32 %v693, %v243
  %v699 = vmul.f32 %v664, %v664
  %v700 = vmul.f32 %v665, %v665
  %v701 = vmul.f32 %v666, %v666
  %v702 = vmul.f32 %v667, %v667
  %v703 = vmul.f32 %v668, %v668
  %v704 = vsub.f32 %v694, %v699
  %v705 = vsub.f32 %v695, %v700
  %v706 = vsub.f32 %v696, %v701
  %v707 = vsub.f32 %v697, %v702
  %v708 = vsub.f32 %v698, %v703
  %v709 = vmax.f32 %v704, 0.0
  %v710 = vmax.f32 %v705, 0.0
  %v711 = vmax.f32 %v706, 0.0
  %v712 = vmax.f32 %v707, 0.0
  %v713 = vmax.f32 %v708, 0.0
  %v714 = vsub.f32 %v639, %v664
  %v715 = vsub.f32 %v640, %v664
  %v716 = vsub.f32 %v641, %v665
  %v717 = vsub.f32 %v642, %v665
  %v718 = vsub.f32 %v643, %v666
  %v719 = vsub.f32 %v644, %v666
  %v720 = vsub.f32 %v645, %v667
  %v721 = vsub.f32 %v646, %v667
  %v722 = vsub.f32 %v647, %v668
  %v723 = vsub.f32 %v648, %v668
  %v724 = vadd.f32 %v709, 1e-05
  %v725 = vadd.f32 %v710, 1e-05
  %v726 = vadd.f32 %v711, 1e-05
  %v727 = vadd.f32 %v712, 1e-05
  %v728 = vadd.f32 %v713, 1e-05
  %v729 = vrsqrt.pop %v724
  %v730 = vrsqrt.pop %v725
  %v731 = vrsqrt.pop %v726
  %v732 = vrsqrt.pop %v727
  %v733 = vrsqrt.pop %v728
  %v734 = vmul.f32 %v714, %v729
  %v735 = vmul.f32 %v715, %v729
  %v736 = vmul.f32 %v716, %v730
  %v737 = vmul.f32 %v717, %v730
  %v738 = vmul.f32 %v718, %v731
  %v739 = vmul.f32 %v719, %v731
  %v740 = vmul.f32 %v720, %v732
  %v741 = vmul.f32 %v721, %v732
  %v742 = vmul.f32 %v722, %v733
  %v743 = vmul.f32 %v723, %v733
  %v744 = vld [vmem:[%s7] sm:$0x3]
  %v746 = vlaneseq
  %v747 = vshrl.u32 %v746, 7
  %v748 = vsub.s32 0, %v747
  %v749 = vrot.slane %v744, %v748
  %v750 = vlaneseq
  %v751 = vshrl.u32 %v750, 7
  %v752 = vsub.s32 1, %v751
  %v753 = vrot.slane %v744, %v752
  %v756 = vmul.f32 %v734, %v749
  %v757 = vmul.f32 %v735, %v753
  %v758 = vmul.f32 %v736, %v749
  %v759 = vmul.f32 %v737, %v753
  %v760 = vmul.f32 %v738, %v749
  %v761 = vmul.f32 %v739, %v753
  %v762 = vmul.f32 %v740, %v749
  %v763 = vmul.f32 %v741, %v753
  %v764 = vmul.f32 %v742, %v749
  %v765 = vmul.f32 %v743, %v753
  %v766 = vld [vmem:[%s8] sm:$0x3]
  %v768 = vlaneseq
  %v769 = vshrl.u32 %v768, 7
  %v770 = vsub.s32 0, %v769
  %v771 = vrot.slane %v766, %v770
  %v772 = vlaneseq
  %v773 = vshrl.u32 %v772, 7
  %v774 = vsub.s32 1, %v773
  %v775 = vrot.slane %v766, %v774
  %v778 = vadd.f32 %v756, %v771
  %v779 = vadd.f32 %v757, %v775
  %v780 = vadd.f32 %v758, %v771
  %v781 = vadd.f32 %v759, %v775
  %v782 = vadd.f32 %v760, %v771
  %v783 = vadd.f32 %v761, %v775
  %v784 = vadd.f32 %v762, %v771
  %v785 = vadd.f32 %v763, %v775
  %v786 = vadd.f32 %v764, %v771
  %v787 = vadd.f32 %v765, %v775
  %v788 = vld [vmem:[%s9] sm:$0x3]
  %v790 = vlaneseq
  %v791 = vshrl.u32 %v790, 7
  %v792 = vsub.s32 0, %v791
  %v793 = vrot.slane %v788, %v792
  %v794 = vlaneseq
  %v795 = vshrl.u32 %v794, 7
  %v796 = vsub.s32 1, %v795
  %v797 = vrot.slane %v788, %v796
  %v800 = vmul.f32 %v778, %v793
  %v801 = vmul.f32 %v779, %v797
  %v802 = vmul.f32 %v780, %v793
  %v803 = vmul.f32 %v781, %v797
  %v804 = vmul.f32 %v782, %v793
  %v805 = vmul.f32 %v783, %v797
  %v806 = vmul.f32 %v784, %v793
  %v807 = vmul.f32 %v785, %v797
  %v808 = vmul.f32 %v786, %v793
  %v809 = vmul.f32 %v787, %v797
  %v810 = vadd.f32 %v800, %v801
  %811 = vadd.xlane.f32.xlu0 %v810
  %v812 = vpop.xlane.xlu0 %811
  %v813 = vadd.f32 %v802, %v803
  %814 = vadd.xlane.f32.xlu0 %v813
  %v815 = vpop.xlane.xlu0 %814
  %v816 = vadd.f32 %v804, %v805
  %817 = vadd.xlane.f32.xlu0 %v816
  %v818 = vpop.xlane.xlu0 %817
  %v819 = vadd.f32 %v806, %v807
  %820 = vadd.xlane.f32.xlu0 %v819
  %v821 = vpop.xlane.xlu0 %820
  %v822 = vadd.f32 %v808, %v809
  %823 = vadd.xlane.f32.xlu0 %v822
  %v824 = vpop.xlane.xlu0 %823
  %v825 = vld [vmem:[#allocation2] sm:$0x1]
  %v827 = vlaneseq
  %v828 = vshrl.u32 %v827, 7
  %v829 = vsub.s32 0, %v828
  %v830 = vrot.slane %v825, %v829
  %v832 = vadd.f32 %v812, %v830
  %v833 = vadd.f32 %v815, %v830
  %v834 = vadd.f32 %v818, %v830
  %v835 = vadd.f32 %v821, %v830
  %v836 = vadd.f32 %v824, %v830
  %vm837 = vcmask 7168
  %838 = vst.msk [vmem:[%s11] sm:$0xff] %vm837, %v832
  %839 = vst.msk [vmem:[%s11 + $0x8] sm:$0xff] %vm837, %v833
  %840 = vst.msk [vmem:[%s11 + $0x10] sm:$0xff] %vm837, %v834
  %841 = vst.msk [vmem:[%s11 + $0x18] sm:$0xff] %vm837, %v835
  %842 = vst.msk [vmem:[%s11 + $0x20] sm:$0xff] %vm837, %v836
  // Predicated region
  $region46: #{_value_forward.1} parent=0 // pred_check
    _
  $region47: #{_value_forward.1} parent=0 // pred_check_branch
    %844 = sbr.rel (0) target = $region49
  $region48: #{_value_forward.1} parent=0 // pred_region
    _
  $region49: #{_value_forward.1} parent=0 // pred_fallthru
    _
  // Predicated region
  $region50: #{_value_forward.1} parent=0 // pred_check
    _
  $region51: #{_value_forward.1} parent=0 // pred_check_branch
    %846 = sbr.rel (0) target = $region53
  $region52: #{_value_forward.1} parent=0 // pred_region
    _
  $region53: #{_value_forward.1} parent=0 // pred_fallthru
    _

</llo_original>
